<compile_context>
chip_gen: v5e
topology: v5e:2x2
jax: 0.10.0
libtpu: 0.0.40
codegen_flags: <defaults>
</compile_context>

<pallas_src>
from functools import partial

import jax
import jax.numpy as jnp
from jax.experimental import pallas as pl
from jax.experimental.pallas import tpu as pltpu


def _cdiv(a, b):
    return (a + b - 1) // b


def _round_up(x, m):
    return _cdiv(x, m) * m


def _contrastive_kernel(margin_ref, x0_ref, x1_ref, y_ref,
                        loss_ref, mdist_ref, dsq_acc,
                        *, B, D, TB, TD):
    i = pl.program_id(0)          # batch tile
    k = pl.program_id(1)          # feature tile (reduction axis, innermost)

    @pl.when(k == 0)
    def _init():
        dsq_acc[...] = jnp.zeros_like(dsq_acc)

    # Inputs stream in their native dtype; cast to f32 in-kernel.
    diff = x0_ref[...].astype(jnp.float32) - x1_ref[...].astype(jnp.float32)

    # Last (partial) feature tile: zero out-of-range columns (no wrapper pad).
    if D % TD != 0:
        col = jax.lax.broadcasted_iota(jnp.int32, (TB, TD), 1)
        diff = jnp.where(col < D - k * TD, diff, 0.0)

    sq = diff * diff

    if TD % 128 == 0:
        # VPU-only lane-wise accumulation; the cross-lane (XLU) reduce is
        # deferred to the finalize step.
        upd = sq[:, 0:128]
        for c in range(1, TD // 128):
            upd = upd + sq[:, c * 128:(c + 1) * 128]
        dsq_acc[...] += upd                                          # (TB, 128)
    else:
        # Single full-D tile with D not a multiple of 128.
        dsq_acc[...] += jnp.sum(sq, axis=1, keepdims=True)           # (TB, 1)

    @pl.when(k == pl.num_programs(1) - 1)
    def _finalize():
        margin = margin_ref[0]
        if TD % 128 == 0:
            dist_sq = jnp.sum(dsq_acc[...], axis=1, keepdims=True)   # (TB, 1)
        else:
            dist_sq = dsq_acc[...]                                   # (TB, 1)
        y = y_ref[...].astype(jnp.float32)                           # (TB, 1)
        dist = jnp.sqrt(dist_sq + 1e-6)
        mdist = margin - dist
        clamped = jnp.maximum(mdist, 0.0)
        per_row = y * dist_sq + (1.0 - y) * (clamped * clamped)
        if B % TB != 0:
            # Last (partial) batch tile: rows >= B hold garbage -> mask to 0.
            row = jax.lax.broadcasted_iota(jnp.int32, (TB, 1), 0)
            per_row = jnp.where(row < B - i * TB, per_row, 0.0)
        loss_ref[...] = jnp.sum(per_row, keepdims=True)              # (1, 1) partial
        mdist_ref[...] = jnp.transpose(mdist)                        # (1, TB) lane-dense


def contrastive_loss(x0, x1, y, margin=1.0, *, block_b=512, block_d=None):
    """x0, x1: (B, D); y: (B,) 0/1 labels. Returns (loss scalar, mdist (B,))."""
    B, D = x0.shape
    itemsize = jnp.dtype(x0.dtype).itemsize

    # Batch tile: multiple of 8 sublanes, capped at block_b, split into >= 2
    # tiles whenever B > 8 so the "parallel" axis shards across v7x's two TCs.
    TB = max(8, min(block_b, _round_up(_cdiv(B, 2), 8)))
    n_b = _cdiv(B, TB)

    # Feature tile: sized in bytes (~4 MiB per input tile, 128-aligned); full
    # D when it already fits.  bf16 inputs get 2x the lanes per DMA.
    if block_d is None:
        block_d = max(128, ((4 << 20) // (TB * itemsize)) // 128 * 128)
    TD = D if D <= block_d else block_d
    n_d = _cdiv(D, TD)

    # No jnp.pad of x0/x1: ragged edges are masked inside the kernel (this
    # kernel is pure HBM streaming; padding would 2-3x the HBM traffic).
    y2d = y.reshape(B, 1)
    margin_arr = jnp.asarray([margin], dtype=jnp.float32)

    acc_w = 128 if TD % 128 == 0 else 1
    in_tile_bytes = TB * TD * itemsize
    # 2 inputs x 2 pipeline buffers + headroom: raise v5e's 16 MiB scoped
    # default, stay well under v7x's 64 MiB physical VMEM.
    vmem_limit = int(min(max(4 * in_tile_bytes + (8 << 20), 32 << 20), 48 << 20))

    cost = pl.CostEstimate(
        flops=3 * B * D + 10 * B,
        transcendentals=B,
        bytes_accessed=2 * B * D * itemsize
        + B * jnp.dtype(y.dtype).itemsize
        + (n_b * TB + n_b) * 4,
    )

    kernel = partial(_contrastive_kernel, B=B, D=D, TB=TB, TD=TD)

    loss_parts, mdist_tiles = pl.pallas_call(
        kernel,
        out_shape=(
            jax.ShapeDtypeStruct((n_b, 1), jnp.float32),    # per-tile partial loss
            jax.ShapeDtypeStruct((n_b, TB), jnp.float32),   # lane-dense mdist rows
        ),
        # Reduction (feature) axis LAST: outputs are written only on the final
        # k step and rely on output-revisit semantics -- do not reorder.
        grid=(n_b, n_d),
        in_specs=[
            pl.BlockSpec(memory_space=pltpu.MemorySpace.SMEM),   # margin scalar
            pl.BlockSpec((TB, TD), lambda i, k: (i, k)),         # x0 tile
            pl.BlockSpec((TB, TD), lambda i, k: (i, k)),         # x1 tile
            pl.BlockSpec((TB, 1), lambda i, k: (i, 0)),          # y column
        ],
        out_specs=(
            pl.BlockSpec((1, 1), lambda i, k: (i, 0)),           # partial loss
            pl.BlockSpec((1, TB), lambda i, k: (i, 0)),          # mdist row
        ),
        scratch_shapes=[pltpu.VMEM((TB, acc_w), jnp.float32)],   # dist_sq acc
        compiler_params=pltpu.CompilerParams(
            dimension_semantics=("parallel", "arbitrary"),
            vmem_limit_bytes=vmem_limit,
        ),
        cost_estimate=cost,
    )(margin_arr, x0, x1, y2d)

    loss = jnp.sum(loss_parts) * (1.0 / B)
    mdist = mdist_tiles.reshape(n_b * TB)[:B]
    return loss, mdist


def _reference(x0, x1, y, margin=1.0):
    x0 = x0.astype(jnp.float32)
    x1 = x1.astype(jnp.float32)
    y = y.astype(jnp.float32)
    diff = x0 - x1
    dist_sq = jnp.sum(diff * diff, axis=1)
    dist = jnp.sqrt(dist_sq + 1e-6)
    mdist = margin - dist
    clamped = jnp.maximum(mdist, 0.0)
    loss = y * dist_sq + (1.0 - y) * clamped ** 2
    return jnp.sum(loss) / x0.shape[0], mdist


if __name__ == "__main__":
    key = jax.random.PRNGKey(0)

    cases = [
        # exact-fit single tile (narrow accumulator path)
        dict(B=8, D=32, margin=1.0, dtype=jnp.float32, kw={}),
        # ragged batch (row-mask path, no padding)
        dict(B=6, D=32, margin=1.0, dtype=jnp.float32, kw={}),
        # multi-tile grid with ragged feature dim (column-mask path)
        dict(B=24, D=200, margin=2.5, dtype=jnp.float32,
             kw=dict(block_b=8, block_d=128)),
        # bf16 inputs, wide (TB,128) accumulator path, 2 batch tiles
        dict(B=16, D=384, margin=1.5, dtype=jnp.bfloat16, kw={}),
    ]
    for c in cases:
        key, k0, k1, ky = jax.random.split(key, 4)
        x0 = jax.random.normal(k0, (c["B"], c["D"]), dtype=jnp.float32).astype(c["dtype"])
        x1 = jax.random.normal(k1, (c["B"], c["D"]), dtype=jnp.float32).astype(c["dtype"])
        y = jax.random.bernoulli(ky, 0.5, (c["B"],)).astype(jnp.float32)

        loss, mdist = contrastive_loss(x0, x1, y, margin=c["margin"], **c["kw"])
        jax.block_until_ready((loss, mdist))

        ref_loss, ref_mdist = _reference(x0, x1, y, margin=c["margin"])
        assert jnp.allclose(loss, ref_loss, atol=1e-4, rtol=1e-5), (loss, ref_loss)
        assert jnp.allclose(mdist, ref_mdist, atol=1e-4, rtol=1e-5)

    print("KERNEL_OK")
</pallas_src>

<mosaic_0001>
module attributes {stable_mosaic.version = 11 : i64} {
  func.func @_contrastive_kernel(%arg0: i32, %arg1: i32, %arg2: memref<1xf32, #tpu.memory_space<smem>>, %arg3: memref<8x32xf32, #tpu.memory_space<vmem>>, %arg4: memref<8x32xf32, #tpu.memory_space<vmem>>, %arg5: memref<8x1xf32, #tpu.memory_space<vmem>>, %arg6: memref<1x1xf32, #tpu.memory_space<vmem>>, %arg7: memref<1x8xf32, #tpu.memory_space<vmem>>, %arg8: memref<8x1xf32, #tpu.memory_space<vmem>>) attributes {dimension_semantics = [#tpu.dimension_semantics<parallel>, #tpu.dimension_semantics<arbitrary>], iteration_bounds = array<i64: 1, 1>, scalar_prefetch = 0 : i64, scratch_operands = 1 : i64, tpu.core_type = #tpu.core_type<tc>, window_params = [{transform_indices = @transform_0, window_bounds = array<i64: 1>}, {transform_indices = @transform_1, window_bounds = array<i64: 8, 32>}, {transform_indices = @transform_2, window_bounds = array<i64: 8, 32>}, {transform_indices = @transform_3, window_bounds = array<i64: 8, 1>}, {transform_indices = @transform_4, window_bounds = array<i64: 1, 1>}, {transform_indices = @transform_5, window_bounds = array<i64: 1, 8>}]} {
    %c0_i32 = arith.constant 0 : i32
    %0 = arith.cmpi eq, %arg1, %c0_i32 : i32
    %1 = arith.extui %0 : i1 to i32
    %c0_i32_0 = arith.constant 0 : i32
    %2 = arith.cmpi ne, %1, %c0_i32_0 : i32
    scf.if %2 {
      %cst_10 = arith.constant 0.000000e+00 : f32
      %15 = vector.broadcast %cst_10 : f32 to vector<8x1xf32>
      %c0_11 = arith.constant 0 : index
      %c0_12 = arith.constant 0 : index
      %16 = vector.load %arg8[%c0_11, %c0_12] : memref<8x1xf32, #tpu.memory_space<vmem>>, vector<8x1xf32>
      tpu.vector_store %arg8[%c0_11, %c0_12], %15 {strides = array<i32>} : memref<8x1xf32, #tpu.memory_space<vmem>>, vector<8x1xf32>,
    } else {
    }
    %c0 = arith.constant 0 : index
    %c0_1 = arith.constant 0 : index
    %3 = vector.load %arg3[%c0, %c0_1] : memref<8x32xf32, #tpu.memory_space<vmem>>, vector<8x32xf32>
    %c0_2 = arith.constant 0 : index
    %c0_3 = arith.constant 0 : index
    %4 = vector.load %arg4[%c0_2, %c0_3] : memref<8x32xf32, #tpu.memory_space<vmem>>, vector<8x32xf32>
    %5 = arith.subf %3, %4 : vector<8x32xf32>
    %6 = arith.mulf %5, %5 : vector<8x32xf32>
    %c0_4 = arith.constant 0 : index
    %c0_5 = arith.constant 0 : index
    %7 = vector.load %arg8[%c0_4, %c0_5] : memref<8x1xf32, #tpu.memory_space<vmem>>, vector<8x1xf32>
    %cst = arith.constant dense<0.000000e+00> : vector<8xf32>
    %8 = vector.multi_reduction <add>, %6, %cst [1] : vector<8x32xf32> to vector<8xf32>
    %9 = vector.shape_cast %8 : vector<8xf32> to vector<8x1xf32>
    %10 = arith.addf %7, %9 : vector<8x1xf32>
    %c0_6 = arith.constant 0 : index
    %c0_7 = arith.constant 0 : index
    %11 = vector.load %arg8[%c0_6, %c0_7] : memref<8x1xf32, #tpu.memory_space<vmem>>, vector<8x1xf32>
    tpu.vector_store %arg8[%c0_6, %c0_7], %10 {strides = array<i32>} : memref<8x1xf32, #tpu.memory_space<vmem>>, vector<8x1xf32>,
    %c0_i32_8 = arith.constant 0 : i32
    %12 = arith.cmpi eq, %arg1, %c0_i32_8 : i32
    %13 = arith.extui %12 : i1 to i32
    %c0_i32_9 = arith.constant 0 : i32
    %14 = arith.cmpi ne, %13, %c0_i32_9 : i32
    scf.if %14 {
      %c0_10 = arith.constant 0 : index
      %15 = memref.load %arg2[%c0_10] : memref<1xf32, #tpu.memory_space<smem>>
      %c0_11 = arith.constant 0 : index
      %c0_12 = arith.constant 0 : index
      %16 = vector.load %arg8[%c0_11, %c0_12] : memref<8x1xf32, #tpu.memory_space<vmem>>, vector<8x1xf32>
      %c0_13 = arith.constant 0 : index
      %c0_14 = arith.constant 0 : index
      %17 = vector.load %arg5[%c0_13, %c0_14] : memref<8x1xf32, #tpu.memory_space<vmem>>, vector<8x1xf32>
      %cst_15 = arith.constant 9.99999997E-7 : f32
      %18 = vector.broadcast %cst_15 : f32 to vector<8x1xf32>
      %19 = arith.addf %16, %18 : vector<8x1xf32>
      %20 = math.sqrt %19 : vector<8x1xf32>
      %21 = vector.broadcast %15 : f32 to vector<8x1xf32>
      %22 = arith.subf %21, %20 : vector<8x1xf32>
      %cst_16 = arith.constant 0.000000e+00 : f32
      %23 = vector.broadcast %cst_16 : f32 to vector<8x1xf32>
      %24 = arith.maximumf %22, %23 : vector<8x1xf32>
      %25 = arith.mulf %17, %16 : vector<8x1xf32>
      %cst_17 = arith.constant 1.000000e+00 : f32
      %26 = vector.broadcast %cst_17 : f32 to vector<8x1xf32>
      %27 = arith.subf %26, %17 : vector<8x1xf32>
      %28 = arith.mulf %24, %24 : vector<8x1xf32>
      %29 = arith.mulf %27, %28 : vector<8x1xf32>
      %30 = arith.addf %25, %29 : vector<8x1xf32>
      %31 = vector.shape_cast %30 : vector<8x1xf32> to vector<1x8x1xf32>
      %cst_18 = arith.constant dense<0.000000e+00> : vector<1xf32>
      %32 = vector.multi_reduction <add>, %31, %cst_18 [1, 2] : vector<1x8x1xf32> to vector<1xf32>
      %33 = vector.shape_cast %32 : vector<1xf32> to vector<1x1x1xf32>
      %34 = vector.extract %33[0, 0, 0] : f32 from vector<1x1x1xf32>
      %35 = vector.broadcast %34 : f32 to vector<1x1xf32>
      %c0_19 = arith.constant 0 : index
      %c0_20 = arith.constant 0 : index
      %36 = vector.load %arg6[%c0_19, %c0_20] : memref<1x1xf32, #tpu.memory_space<vmem>>, vector<1x1xf32>
      tpu.vector_store %arg6[%c0_19, %c0_20], %35 {strides = array<i32>} : memref<1x1xf32, #tpu.memory_space<vmem>>, vector<1x1xf32>,
      %37 = tpu.transpose %22, [1, 0] : vector<8x1xf32> -> vector<1x8xf32>
      %c0_21 = arith.constant 0 : index
      %c0_22 = arith.constant 0 : index
      %38 = vector.load %arg7[%c0_21, %c0_22] : memref<1x8xf32, #tpu.memory_space<vmem>>, vector<1x8xf32>
      tpu.vector_store %arg7[%c0_21, %c0_22], %37 {strides = array<i32>} : memref<1x8xf32, #tpu.memory_space<vmem>>, vector<1x8xf32>,
    } else {
    }
    return
  }
  func.func @transform_0(%arg0: i32, %arg1: i32) -> i32 {
    %c0_i32 = arith.constant 0 : i32
    %c0_i32_0 = arith.constant 0 : i32
    return %c0_i32 : i32
  }
  func.func @transform_1(%arg0: i32, %arg1: i32) -> (i32, i32) {
    %c0_i32 = arith.constant 0 : i32
    return %arg0, %arg1 : i32, i32
  }
  func.func @transform_2(%arg0: i32, %arg1: i32) -> (i32, i32) {
    %c0_i32 = arith.constant 0 : i32
    return %arg0, %arg1 : i32, i32
  }
  func.func @transform_3(%arg0: i32, %arg1: i32) -> (i32, i32) {
    %c0_i32 = arith.constant 0 : i32
    %c0_i32_0 = arith.constant 0 : i32
    return %arg0, %c0_i32 : i32, i32
  }
  func.func @transform_4(%arg0: i32, %arg1: i32) -> (i32, i32) {
    %c0_i32 = arith.constant 0 : i32
    %c0_i32_0 = arith.constant 0 : i32
    return %arg0, %c0_i32 : i32, i32
  }
  func.func @transform_5(%arg0: i32, %arg1: i32) -> (i32, i32) {
    %c0_i32 = arith.constant 0 : i32
    %c0_i32_0 = arith.constant 0 : i32
    return %arg0, %c0_i32 : i32, i32
  }
}

</mosaic_0001>

<llo_original>
// kernel: tpu_custom_call.1
$region0: #{tpu_custom_call.1}
  #allocation0 [shape = 'u32[]', space=smem, size = 0x4, offset = 0x4, fixed_abs, tag = 'smem constant byte address 0x4 - core index']
  #allocation1 [shape = 'u32[72,128]{1,0:T(1,128)}', space=vmem, size = 0x9000, scoped, tag = 'internal scratch']
  #allocation2 [shape = 'f32[8,1]{1,0:T(8,128)}', space=vmem, size = 0x1000, scoped, tag = 'scratch operand']
  #allocation3 [shape = 'f32[1]{0:T(128)S(6)}', space=smem, size = 0x200, scoped, tag = 'scoped memory for tpu_custom_call.1']
  %s0 = inlined_call_operand.<no memory space> [shape: f32[1], index: 0, kind: input, shape index: {}]
  %s1 = inlined_call_operand.vmem [shape: f32[8,32], index: 1, kind: input, shape index: {}]
  %s2 = inlined_call_operand.hbm [shape: f32[8,32], index: 2, kind: input, shape index: {}]
  %s3 = inlined_call_operand.vmem [shape: f32[8,1], index: 3, kind: input, shape index: {}]
  %s4 = inlined_call_operand.hbm [shape: f32[1,1], index: 4, kind: output, shape index: {0}]
  %s5 = inlined_call_operand.hbm [shape: f32[1,8], index: 5, kind: output, shape index: {1}]
  %6 = xla_tuple %s4, %s5
  %s7 = sld [smem:[#allocation0]]
  $region46: #{tpu_custom_call.1} parent=0
    _
  %s9 = ssub.s32 1, %s7
  %s10 = scalar_select 0, %s9, %s7
  %11 = sst [smem:[#allocation3]] %s0
  $region1: #{tpu_custom_call.1} parent=0
    #allocation4 [shape = 'u8[4096]{0}', space=vmem, size = 0x1000, scoped, tag = 'input window, operand 2, single buffered']
    #allocation5 [shape = 's32[1]{0}', space=sflag, size = 0x4, scoped, tag = 'scoped memory for tpu_custom_call.1']
    #allocation6 [shape = 's32[1]{0}', space=sflag, size = 0x4, scoped, tag = 'scoped memory for tpu_custom_call.1']
    #allocation7 [shape = 'u8[512]{0}', space=vmem, size = 0x400, scoped, tag = 'output window, operand 0, single buffered']
    #allocation8 [shape = 'u8[512]{0}', space=vmem, size = 0x400, scoped, tag = 'output window, operand 1, single buffered']
    #allocation9 [shape = 's32[1]{0}', space=sflag, size = 0x4, scoped, tag = 'scoped memory for tpu_custom_call.1']
    %12 = vsyncpa [#allocation5], 0
    %13 = vsyncpa [#allocation6], 0
    %14 = vsyncpa [#allocation9], 0
    // Predicated region
    $region2: #{tpu_custom_call.1} parent=1 // pred_check
      _
    $region3: #{tpu_custom_call.1} parent=1 // pred_check_branch
      %16 = sbr.rel (0) target = $region5
    $region4: #{tpu_custom_call.1} parent=1 // pred_region
      _
    $region5: #{tpu_custom_call.1} parent=1 // pred_fallthru
      _
    // Predicated region
    $region6: #{tpu_custom_call.1} parent=1 // pred_check
      _
    $region7: #{tpu_custom_call.1} parent=1 // pred_check_branch
      %18 = sbr.rel (0) target = $region9
    $region8: #{tpu_custom_call.1} parent=1 // pred_region
      _
    $region9: #{tpu_custom_call.1} parent=1 // pred_fallthru
      _
    // Predicated region
    $region10: #{tpu_custom_call.1} parent=1 // pred_check
      _
    $region11: #{tpu_custom_call.1} parent=1 // pred_check_branch
      %20 = sbr.rel (0) target = $region13
    $region12: #{tpu_custom_call.1} parent=1 // pred_region
      %22 = vsyncadd [#allocation5], 0
      %s24 = sshll.u32 %s2, 4
      %s25 = int_to_ptr.hbm [resolvable:$true] %s24
      %s26 = sshll.u32 [#allocation4], 4
      %s27 = int_to_ptr.vmem [resolvable:$true] %s26
      %29 = dma.hbm_to_vmem [thread:$0]  %s25, 128, %s27, [#allocation5]
    $region13: #{tpu_custom_call.1} parent=1 // pred_fallthru
      _
    // Predicated region
    $region14: #{tpu_custom_call.1} parent=1 // pred_check
      _
    $region15: #{tpu_custom_call.1} parent=1 // pred_check_branch
      %31 = sbr.rel (0) target = $region17
    $region16: #{tpu_custom_call.1} parent=1 // pred_region
      _
    $region17: #{tpu_custom_call.1} parent=1 // pred_fallthru
      _
    // Predicated region
    $region18: #{tpu_custom_call.1} parent=1 // pred_check
      _
    $region19: #{tpu_custom_call.1} parent=1 // pred_check_branch
      %33 = sbr.rel (0) target = $region21
    $region20: #{tpu_custom_call.1} parent=1 // pred_region
      %35 = dma.done [#allocation5], 128
    $region21: #{tpu_custom_call.1} parent=1 // pred_fallthru
      _
    %p36 = scmp.eq.s32.totalorder 0, 0
    // Predicated region
    $region22: #{tpu_custom_call.1} parent=1 // pred_check
      %p37 = pneg %p36
    $region23: #{tpu_custom_call.1} parent=1 // pred_check_branch
      %39 = sbr.rel (%p37) target = $region25
    $region24: #{tpu_custom_call.1} parent=1 // pred_region
      %vm40 = vcmask 7168
      %41 = vst.msk [vmem:[#allocation2] sm:$0xff] %vm40, 0.0
    $region25: #{tpu_custom_call.1} parent=1 // pred_fallthru
      _
    %v42 = vld [vmem:[%s1] sm:$0xff]
    %v43 = vld [vmem:[#allocation4] sm:$0xff]
    %v44 = vsub.f32 %v42, %v43
    %v45 = vmul.f32 %v44, %v44
    %v46 = vld [vmem:[#allocation2] sm:$0xff]
    %vm47 = vcmask 261120
    %v48 = vsel %vm47, %v45, 0.0
    %49 = vadd.xlane.f32.xlu0 %v48
    %v50 = vpop.xlane.xlu0 %49
    %v51 = vadd.f32 %v46, %v50
    %vm52 = vcmask 7168
    %53 = vst.msk [vmem:[#allocation2] sm:$0xff] %vm52, %v51
    // Predicated region
    $region26: #{tpu_custom_call.1} parent=1 // pred_check
      %p54 = pneg %p36
    $region27: #{tpu_custom_call.1} parent=1 // pred_check_branch
      %56 = sbr.rel (%p54) target = $region29
    $region28: #{tpu_custom_call.1} parent=1 // pred_region
      %s57 = sld [smem:[#allocation3]]
      %v58 = vld [vmem:[#allocation2] sm:$0xff]
      %v59 = vld [vmem:[%s3] sm:$0xff]
      %v60 = vadd.f32 %v58, 1e-06
      %v61 = vrsqrt.pop %v60
      %v62 = vmul.f32 %v61, %v60
      %v63 = vmul.f32 %v62, %v61
      %v64 = vmul.f32 0.5, %v63
      %v65 = vsub.f32 1.5, %v64
      %v66 = vmul.f32 %v61, %v65
      %v67 = vmul.f32 %v60, %v66
      %vm68 = vcmp.eq.f32.partialorder %v60, inf
      %v69 = vsel %vm68, %v60, %v67
      %vm70 = vcmp.eq.f32.partialorder %v60, 0.0
      %v71 = vand.u32 %v60, 2147483648
      %v72 = vsel %vm70, %v71, %v69
      %v73 = vstv %s57
      %v74 = vsub.f32 %v73, %v72
      %v75 = vmax.f32 %v74, 0.0
      %v76 = vmul.f32 %v59, %v58
      %v77 = vsub.f32 1.0, %v59
      %v78 = vmul.f32 %v75, %v75
      %v79 = vmul.f32 %v77, %v78
      %v80 = vadd.f32 %v76, %v79
      %v81 = vsel %vm52, %v80, 0.0
      %82 = vadd.xlane.f32.xlu0 %v81
      %v83 = vpop.xlane.xlu0 %82
      %v84 = vrot.slane %v83, 4
      %v85 = vadd.f32 %v83, %v84
      %v86 = vrot.slane %v85, 2
      %v87 = vadd.f32 %v85, %v86
      %v88 = vrot.slane %v87, 1
      %v89 = vadd.f32 %v87, %v88
      %s90 = vtos %v89
      %v91 = vstv %s90
      %vm92 = vcmask 0
      %93 = vst.msk [vmem:[#allocation7] sm:$0x1] %vm92, %v91
      %94 = vxpose.xlu0.b32.start [1/16] %v74, 128
      %95 = vxpose.xlu0.b32.cont [2/16] 0.0, 128
      %96 = vxpose.xlu0.b32.cont [3/16] 0.0, 128
      %97 = vxpose.xlu0.b32.cont [4/16] 0.0, 128
      %98 = vxpose.xlu0.b32.cont [5/16] 0.0, 128
      %99 = vxpose.xlu0.b32.cont [6/16] 0.0, 128
      %100 = vxpose.xlu0.b32.cont [7/16] 0.0, 128
      %101 = vxpose.xlu0.b32.cont [8/16] 0.0, 128
      %102 = vxpose.xlu0.b32.cont [9/16] 0.0, 128
      %103 = vxpose.xlu0.b32.cont [10/16] 0.0, 128
      %104 = vxpose.xlu0.b32.cont [11/16] 0.0, 128
      %105 = vxpose.xlu0.b32.cont [12/16] 0.0, 128
      %106 = vxpose.xlu0.b32.cont [13/16] 0.0, 128
      %107 = vxpose.xlu0.b32.cont [14/16] 0.0, 128
      %108 = vxpose.xlu0.b32.cont [15/16] 0.0, 128
      %109 = vxpose.xlu0.b32.end [16/16] 0.0, 128
      %v110 = vpop.trf.xlu0
      %v111 = vpop.trf.xlu0
      %v112 = vpop.trf.xlu0
      %v113 = vpop.trf.xlu0
      %v114 = vpop.trf.xlu0
      %v115 = vpop.trf.xlu0
      %v116 = vpop.trf.xlu0
      %v117 = vpop.trf.xlu0
      %v118 = vpop.trf.xlu0
      %v119 = vpop.trf.xlu0
      %v120 = vpop.trf.xlu0
      %v121 = vpop.trf.xlu0
      %v122 = vpop.trf.xlu0
      %v123 = vpop.trf.xlu0
      %v124 = vpop.trf.xlu0
      %v125 = vpop.trf.xlu0
      %vm126 = vcmask 57344
      %127 = vst.msk [vmem:[#allocation8] sm:$0x1] %vm126, %v110
    $region29: #{tpu_custom_call.1} parent=1 // pred_fallthru
      _
    // Predicated region
    $region30: #{tpu_custom_call.1} parent=1 // pred_check
      _
    $region31: #{tpu_custom_call.1} parent=1 // pred_check_branch
      %129 = sbr.rel (0) target = $region33
    $region32: #{tpu_custom_call.1} parent=1 // pred_region
      %131 = vsyncadd [#allocation6], 0
      %s133 = sshll.u32 [#allocation7], 4
      %s134 = int_to_ptr.vmem [resolvable:$true] %s133
      %s135 = sshll.u32 %s4, 4
      %s136 = int_to_ptr.hbm [resolvable:$true] %s135
      %138 = dma.vmem_to_hbm [thread:$0]  %s134, 16, %s136, [#allocation6]
    $region33: #{tpu_custom_call.1} parent=1 // pred_fallthru
      _
    // Predicated region
    $region34: #{tpu_custom_call.1} parent=1 // pred_check
      _
    $region35: #{tpu_custom_call.1} parent=1 // pred_check_branch
      %140 = sbr.rel (0) target = $region37
    $region36: #{tpu_custom_call.1} parent=1 // pred_region
      %142 = vsyncadd [#allocation9], 0
      %s144 = sshll.u32 [#allocation8], 4
      %s145 = int_to_ptr.vmem [resolvable:$true] %s144
      %s146 = sshll.u32 %s5, 4
      %s147 = int_to_ptr.hbm [resolvable:$true] %s146
      %149 = dma.vmem_to_hbm [thread:$0]  %s145, 16, %s147, [#allocation9]
    $region37: #{tpu_custom_call.1} parent=1 // pred_fallthru
      _
    // Predicated region
    $region38: #{tpu_custom_call.1} parent=1 // pred_check
      _
    $region39: #{tpu_custom_call.1} parent=1 // pred_check_branch
      %151 = sbr.rel (0) target = $region41
    $region40: #{tpu_custom_call.1} parent=1 // pred_region
      %153 = dma.done [#allocation6], 16
    $region41: #{tpu_custom_call.1} parent=1 // pred_fallthru
      _
    // Predicated region
    $region42: #{tpu_custom_call.1} parent=1 // pred_check
      _
    $region43: #{tpu_custom_call.1} parent=1 // pred_check_branch
      %155 = sbr.rel (0) target = $region45
    $region44: #{tpu_custom_call.1} parent=1 // pred_region
      %157 = dma.done [#allocation9], 16
    $region45: #{tpu_custom_call.1} parent=1 // pred_fallthru
      _
    %158 = vsyncpa [#allocation5], 1
    %159 = vsyncpa [#allocation6], 1
    %160 = vsyncpa [#allocation9], 1

</llo_original>
